<compile_context>
chip_gen: v5e
topology: v5e:2x2
jax: 0.10.0
libtpu: 0.0.40
codegen_flags: <defaults>
</compile_context>

<pallas_src>
import functools

import jax
import jax.numpy as jnp
from jax.experimental import pallas as pl
from jax.experimental.pallas import tpu as pltpu


def _round_up(n, m):
    return ((n + m - 1) // m) * m


def _mlp_kernel(xT_ref, w1T_ref, b1_ref, w2T_ref, b2_ref, oT_ref):
    # xT : (obs_pad, TB)   batch on lanes
    # w1T: (H_pad, obs_pad)
    # b1 : (H_pad, 1)
    # w2T: (A_pad, H_pad)
    # b2 : (A_pad, 1)
    # oT : (A_pad, TB)
    xT = xT_ref[...]
    h = jnp.dot(w1T_ref[...], xT, preferred_element_type=jnp.float32) + b1_ref[...]
    h = jnp.maximum(h, 0.0)                               # ReLU(inplace=True)
    out = jnp.dot(w2T_ref[...], h, preferred_element_type=jnp.float32) + b2_ref[...]
    oT_ref[...] = out.astype(oT_ref.dtype)


@functools.partial(jax.jit, static_argnames=("tile_b",))
def states_network_forward(x, w1, b1, w2, b2, *, tile_b=256):
    """Forward pass of StatesNetwork: relu(x @ W1 + b1) @ W2 + b2."""
    # Flatten like x.view(x.size(0), -1)
    B = x.shape[0]
    x2 = x.reshape(B, -1).astype(jnp.float32)
    obs = x2.shape[1]
    H = w1.shape[1]
    A = w2.shape[1]

    # Padded, transposed layout: batch on the lane (last) axis.
    OBS_P = _round_up(obs, 8)        # sublane multiple (f32)
    H_P = _round_up(H, 8)            # 50 -> 56
    A_P = _round_up(A, 8)            # 2  -> 8
    TB = min(int(tile_b), _round_up(B, 128))   # tile_b assumed multiple of 128
    B_P = _round_up(B, TB)
    num_tiles = B_P // TB

    xT = jnp.pad(x2.T, ((0, OBS_P - obs), (0, B_P - B)))                      # (OBS_P, B_P)
    w1T = jnp.pad(w1.astype(jnp.float32).T, ((0, H_P - H), (0, OBS_P - obs)))  # (H_P, OBS_P)
    b1p = jnp.pad(b1.astype(jnp.float32).reshape(H, 1), ((0, H_P - H), (0, 0)))  # (H_P, 1)
    w2T = jnp.pad(w2.astype(jnp.float32).T, ((0, A_P - A), (0, H_P - H)))      # (A_P, H_P)
    b2p = jnp.pad(b2.astype(jnp.float32).reshape(A, 1), ((0, A_P - A), (0, 0)))  # (A_P, 1)

    flops = 2 * B_P * (OBS_P * H_P + H_P * A_P)
    bytes_accessed = 4 * (xT.size + w1T.size + b1p.size + w2T.size + b2p.size + A_P * B_P)
    ce = pl.CostEstimate(flops=flops, transcendentals=0, bytes_accessed=bytes_accessed)

    out_shape = jax.ShapeDtypeStruct((A_P, B_P), jnp.float32)

    if num_tiles == 1:
        # Small batch: whole problem resident in VMEM, no grid, no pipelining
        # overhead.
        outT = pl.pallas_call(
            _mlp_kernel,
            out_shape=out_shape,
            in_specs=[pl.BlockSpec(memory_space=pltpu.MemorySpace.VMEM)] * 5,
            out_specs=pl.BlockSpec(memory_space=pltpu.MemorySpace.VMEM),
            cost_estimate=ce,
        )(xT, w1T, b1p, w2T, b2p)
    else:
        # Large batch: tile only over B; weights/biases stay VMEM-resident
        # across the grid.  Batch axis is parallel (megacore-shardable on v7x).
        outT = pl.pallas_call(
            _mlp_kernel,
            out_shape=out_shape,
            grid=(num_tiles,),
            in_specs=[
                pl.BlockSpec((OBS_P, TB), lambda i: (0, i)),   # x^T tile
                pl.BlockSpec((H_P, OBS_P), lambda i: (0, 0)),  # W1^T resident
                pl.BlockSpec((H_P, 1), lambda i: (0, 0)),      # b1 resident
                pl.BlockSpec((A_P, H_P), lambda i: (0, 0)),    # W2^T resident
                pl.BlockSpec((A_P, 1), lambda i: (0, 0)),      # b2 resident
            ],
            out_specs=pl.BlockSpec((A_P, TB), lambda i: (0, i)),
            compiler_params=pltpu.CompilerParams(
                dimension_semantics=("parallel",),
            ),
            cost_estimate=ce,
        )(xT, w1T, b1p, w2T, b2p)

    # Strip padding and return batch-major (B, A), matching the PyTorch module.
    return outT[:A, :B].T


def init_params(key, num_observation, hidden, num_action):
    # Deterministic init mirroring nn.Linear default: U(-1/sqrt(fan_in), 1/sqrt(fan_in))
    k1, k2, k3, k4 = jax.random.split(key, 4)
    bound1 = 1.0 / jnp.sqrt(num_observation)
    bound2 = 1.0 / jnp.sqrt(hidden)
    w1 = jax.random.uniform(k1, (num_observation, hidden), jnp.float32, -bound1, bound1)
    b1 = jax.random.uniform(k2, (hidden,), jnp.float32, -bound1, bound1)
    w2 = jax.random.uniform(k3, (hidden, num_action), jnp.float32, -bound2, bound2)
    b2 = jax.random.uniform(k4, (num_action,), jnp.float32, -bound2, bound2)
    return w1, b1, w2, b2


if __name__ == "__main__":
    # Example env: observation_space.shape = (4,) (e.g. CartPole), action_space.n = 2
    NUM_OBS = 4
    HIDDEN = 50
    NUM_ACT = 2
    BATCH = 8

    key = jax.random.PRNGKey(0)
    kx, kp = jax.random.split(key)
    x = jax.random.normal(kx, (BATCH, NUM_OBS), jnp.float32)
    w1, b1, w2, b2 = init_params(kp, NUM_OBS, HIDDEN, NUM_ACT)

    # Small-batch path (single VMEM-resident call, no grid).
    out = jax.block_until_ready(states_network_forward(x, w1, b1, w2, b2))
    ref = jnp.maximum(x @ w1 + b1, 0.0) @ w2 + b2
    assert out.shape == (BATCH, NUM_ACT)
    assert jnp.allclose(out, ref, atol=1e-5, rtol=1e-5)

    # Larger, non-aligned batch exercises the batch-tiled (parallel grid) path.
    BATCH2 = 300
    xb = jax.random.normal(jax.random.PRNGKey(1), (BATCH2, NUM_OBS), jnp.float32)
    out2 = jax.block_until_ready(
        states_network_forward(xb, w1, b1, w2, b2, tile_b=128)
    )
    ref2 = jnp.maximum(xb @ w1 + b1, 0.0) @ w2 + b2
    assert out2.shape == (BATCH2, NUM_ACT)
    assert jnp.allclose(out2, ref2, atol=1e-5, rtol=1e-5)

    print("KERNEL_OK")
</pallas_src>

<mosaic_0001>
module attributes {stable_mosaic.version = 11 : i64} {
  func.func @_mlp_kernel(%arg0: memref<8x128xf32, #tpu.memory_space<vmem>>, %arg1: memref<56x8xf32, #tpu.memory_space<vmem>>, %arg2: memref<56x1xf32, #tpu.memory_space<vmem>>, %arg3: memref<8x56xf32, #tpu.memory_space<vmem>>, %arg4: memref<8x1xf32, #tpu.memory_space<vmem>>, %arg5: memref<8x128xf32, #tpu.memory_space<vmem>>) attributes {dimension_semantics = [], scalar_prefetch = 0 : i64, scratch_operands = 0 : i64, tpu.core_type = #tpu.core_type<tc>} {
    %c0 = arith.constant 0 : index
    %c0_0 = arith.constant 0 : index
    %0 = vector.load %arg0[%c0, %c0_0] : memref<8x128xf32, #tpu.memory_space<vmem>>, vector<8x128xf32>
    %c0_1 = arith.constant 0 : index
    %c0_2 = arith.constant 0 : index
    %1 = vector.load %arg1[%c0_1, %c0_2] : memref<56x8xf32, #tpu.memory_space<vmem>>, vector<56x8xf32>
    %cst = arith.constant dense<0.000000e+00> : vector<56x128xf32>
    %2 = tpu.matmul %1, %0, %cst {dimension_numbers = #tpu.dot_dimension_numbers<[1], [0], [0], [1], [0, 0, 1, 1], [], []>} : vector<56x8xf32>, vector<8x128xf32>, vector<56x128xf32> -> vector<56x128xf32>
    %c0_3 = arith.constant 0 : index
    %c0_4 = arith.constant 0 : index
    %3 = vector.load %arg2[%c0_3, %c0_4] : memref<56x1xf32, #tpu.memory_space<vmem>>, vector<56x1xf32>
    %4 = vector.broadcast %3 : vector<56x1xf32> to vector<56x128xf32>
    %5 = arith.addf %2, %4 : vector<56x128xf32>
    %cst_5 = arith.constant 0.000000e+00 : f32
    %6 = vector.broadcast %cst_5 : f32 to vector<56x128xf32>
    %7 = arith.maximumf %5, %6 : vector<56x128xf32>
    %c0_6 = arith.constant 0 : index
    %c0_7 = arith.constant 0 : index
    %8 = vector.load %arg3[%c0_6, %c0_7] : memref<8x56xf32, #tpu.memory_space<vmem>>, vector<8x56xf32>
    %cst_8 = arith.constant dense<0.000000e+00> : vector<8x128xf32>
    %9 = tpu.matmul %8, %7, %cst_8 {dimension_numbers = #tpu.dot_dimension_numbers<[1], [0], [0], [1], [0, 0, 1, 1], [], []>} : vector<8x56xf32>, vector<56x128xf32>, vector<8x128xf32> -> vector<8x128xf32>
    %c0_9 = arith.constant 0 : index
    %c0_10 = arith.constant 0 : index
    %10 = vector.load %arg4[%c0_9, %c0_10] : memref<8x1xf32, #tpu.memory_space<vmem>>, vector<8x1xf32>
    %11 = vector.broadcast %10 : vector<8x1xf32> to vector<8x128xf32>
    %12 = arith.addf %9, %11 : vector<8x128xf32>
    %c0_11 = arith.constant 0 : index
    %c0_12 = arith.constant 0 : index
    %13 = vector.load %arg5[%c0_11, %c0_12] : memref<8x128xf32, #tpu.memory_space<vmem>>, vector<8x128xf32>
    tpu.vector_store %arg5[%c0_11, %c0_12], %12 {strides = array<i32>} : memref<8x128xf32, #tpu.memory_space<vmem>>, vector<8x128xf32>,
    return
  }
}

</mosaic_0001>

<llo_original>
// kernel: states_network_forward.1
$region0: #{states_network_forward.1}
  #allocation0 [shape = 'u32[]', space=smem, size = 0x4, offset = 0x4, fixed_abs, tag = 'smem constant byte address 0x4 - core index']
  #allocation1 [shape = 'u32[72,128]{1,0:T(1,128)}', space=vmem, size = 0x9000, scoped, tag = 'internal scratch']
  %s0 = inlined_call_operand.vmem [shape: f32[8,128], index: 0, kind: input, shape index: {}]
  %s1 = inlined_call_operand.vmem [shape: f32[56,8], index: 1, kind: input, shape index: {}]
  %s2 = inlined_call_operand.vmem [shape: f32[56,1], index: 2, kind: input, shape index: {}]
  %s3 = inlined_call_operand.vmem [shape: f32[8,56], index: 3, kind: input, shape index: {}]
  %s4 = inlined_call_operand.vmem [shape: f32[8,1], index: 4, kind: input, shape index: {}]
  %s5 = inlined_call_operand.vmem [shape: f32[8,128], index: 5, kind: output, shape index: {}]
  %s6 = sld [smem:[#allocation0]]
  $region30: #{states_network_forward.1} parent=0
    _
  %s8 = ssub.s32 1, %s6
  %s9 = scalar_select 0, %s8, %s6
  // Predicated region
  $region2: #{states_network_forward.1} parent=0 // pred_check
    _
  $region3: #{states_network_forward.1} parent=0 // pred_check_branch
    %11 = sbr.rel (0) target = $region5
  $region4: #{states_network_forward.1} parent=0 // pred_region
    _
  $region5: #{states_network_forward.1} parent=0 // pred_fallthru
    _
  // Predicated region
  $region6: #{states_network_forward.1} parent=0 // pred_check
    _
  $region7: #{states_network_forward.1} parent=0 // pred_check_branch
    %13 = sbr.rel (0) target = $region9
  $region8: #{states_network_forward.1} parent=0 // pred_region
    _
  $region9: #{states_network_forward.1} parent=0 // pred_fallthru
    _
  // Predicated region
  $region10: #{states_network_forward.1} parent=0 // pred_check
    _
  $region11: #{states_network_forward.1} parent=0 // pred_check_branch
    %15 = sbr.rel (0) target = $region13
  $region12: #{states_network_forward.1} parent=0 // pred_region
    _
  $region13: #{states_network_forward.1} parent=0 // pred_fallthru
    _
  // Predicated region
  $region14: #{states_network_forward.1} parent=0 // pred_check
    _
  $region15: #{states_network_forward.1} parent=0 // pred_check_branch
    %17 = sbr.rel (0) target = $region17
  $region16: #{states_network_forward.1} parent=0 // pred_region
    _
  $region17: #{states_network_forward.1} parent=0 // pred_fallthru
    _
  // Predicated region
  $region18: #{states_network_forward.1} parent=0 // pred_check
    _
  $region19: #{states_network_forward.1} parent=0 // pred_check_branch
    %19 = sbr.rel (0) target = $region21
  $region20: #{states_network_forward.1} parent=0 // pred_region
    _
  $region21: #{states_network_forward.1} parent=0 // pred_fallthru
    _
  %v20 = vld [vmem:[%s0] sm:$0xff]
  %v21 = vld [vmem:[%s1] sm:$0xff]
  %v22 = vld [vmem:[%s1 + $0x8] sm:$0xff]
  %v23 = vld [vmem:[%s1 + $0x10] sm:$0xff]
  %v24 = vld [vmem:[%s1 + $0x18] sm:$0xff]
  %v25 = vld [vmem:[%s1 + $0x20] sm:$0xff]
  %v26 = vld [vmem:[%s1 + $0x28] sm:$0xff]
  %v27 = vld [vmem:[%s1 + $0x30] sm:$0xff]
  %v28 = vld [vmem:[%s2] sm:$0xff]
  %v29 = vld [vmem:[%s2 + $0x8] sm:$0xff]
  %v30 = vld [vmem:[%s2 + $0x10] sm:$0xff]
  %v31 = vld [vmem:[%s2 + $0x18] sm:$0xff]
  %v32 = vld [vmem:[%s2 + $0x20] sm:$0xff]
  %v33 = vld [vmem:[%s2 + $0x28] sm:$0xff]
  %v34 = vld [vmem:[%s2 + $0x30] sm:$0xff]
  %36 = vset.pattern.permute.xlu0 0
  %37 = vperm.xlu0 %36, %v28
  %v38 = vpop.permute.xlu0 %37
  %41 = vset.pattern.permute.xlu0 0
  %42 = vperm.xlu0 %41, %v29
  %v43 = vpop.permute.xlu0 %42
  %46 = vset.pattern.permute.xlu0 0
  %47 = vperm.xlu0 %46, %v30
  %v48 = vpop.permute.xlu0 %47
  %51 = vset.pattern.permute.xlu0 0
  %52 = vperm.xlu0 %51, %v31
  %v53 = vpop.permute.xlu0 %52
  %56 = vset.pattern.permute.xlu0 0
  %57 = vperm.xlu0 %56, %v32
  %v58 = vpop.permute.xlu0 %57
  %61 = vset.pattern.permute.xlu0 0
  %62 = vperm.xlu0 %61, %v33
  %v63 = vpop.permute.xlu0 %62
  %66 = vset.pattern.permute.xlu0 0
  %67 = vperm.xlu0 %66, %v34
  %v68 = vpop.permute.xlu0 %67
  %vm70 = vcmask 64512
  %v72 = vsel %vm70, %v21, 0
  %v75 = vsel %vm70, %v22, 0
  %v78 = vsel %vm70, %v23, 0
  %v81 = vsel %vm70, %v24, 0
  %v84 = vsel %vm70, %v25, 0
  %v87 = vsel %vm70, %v26, 0
  %v90 = vsel %vm70, %v27, 0
  %92 = vmatpush.msra.mxu0 0.0
  %93 = vmatpush.msra.mxu0 0.0
  %94 = vmatpush.msra.mxu0 0.0
  %95 = vmatpush.msra.mxu0 0.0
  %96 = vmatpush.msra.mxu0 0.0
  %97 = vmatpush.msra.mxu0 0.0
  %98 = vmatpush.msra.mxu0 0.0
  %99 = vmatpush.msra.mxu0 0.0
  %100 = vmatpush.msra.mxu0 0.0
  %101 = vmatpush.msra.mxu0 0.0
  %102 = vmatpush.msra.mxu0 0.0
  %103 = vmatpush.msra.mxu0 0.0
  %104 = vmatpush.msra.mxu0 0.0
  %105 = vmatpush.msra.mxu0 0.0
  %106 = vmatpush.msra.mxu0 0.0
  %107 = vmatpush.msra.mxu0 %v20
  %108 = vmatmul.f32.gmra.mxu0 %v72
  %v109 = vpop.f32.mrf.mxu0
  %v110 = vadd.f32 %v38, %v109
  %111 = vmatmul.f32.gmra.mxu0 %v75
  %v112 = vpop.f32.mrf.mxu0
  %v113 = vadd.f32 %v43, %v112
  %114 = vmatmul.f32.gmra.mxu0 %v78
  %v115 = vpop.f32.mrf.mxu0
  %v116 = vadd.f32 %v48, %v115
  %117 = vmatmul.f32.gmra.mxu0 %v81
  %v118 = vpop.f32.mrf.mxu0
  %v119 = vadd.f32 %v53, %v118
  %120 = vmatmul.f32.gmra.mxu0 %v84
  %v121 = vpop.f32.mrf.mxu0
  %v122 = vadd.f32 %v58, %v121
  %123 = vmatmul.f32.gmra.mxu0 %v87
  %v124 = vpop.f32.mrf.mxu0
  %v125 = vadd.f32 %v63, %v124
  %126 = vmatmul.f32.gmra.mxu0 %v90
  %v127 = vpop.f32.mrf.mxu0
  %v128 = vadd.f32 %v68, %v127
  %129 = vdwg.mxu0
  %v130 = vmax.f32 %v110, 0.0
  %v131 = vmax.f32 %v113, 0.0
  %v132 = vmax.f32 %v116, 0.0
  %v133 = vmax.f32 %v119, 0.0
  %v134 = vmax.f32 %v122, 0.0
  %v135 = vmax.f32 %v125, 0.0
  %v136 = vmax.f32 %v128, 0.0
  %v137 = vld [vmem:[%s3] sm:$0xff]
  %v138 = vld [vmem:[%s4] sm:$0xff]
  %140 = vset.pattern.permute.xlu0 0
  %141 = vperm.xlu0 %140, %v138
  %v142 = vpop.permute.xlu0 %141
  %vm144 = vcmask 457728
  %v146 = vsel %vm144, %v137, 0
  %148 = vmatpush.msra.mxu0 0.0
  %149 = vmatpush.msra.mxu0 0.0
  %150 = vmatpush.msra.mxu0 0.0
  %151 = vmatpush.msra.mxu0 0.0
  %152 = vmatpush.msra.mxu0 0.0
  %153 = vmatpush.msra.mxu0 0.0
  %154 = vmatpush.msra.mxu0 0.0
  %155 = vmatpush.msra.mxu0 0.0
  %156 = vmatpush.msra.mxu0 0.0
  %157 = vmatpush.msra.mxu0 %v136
  %158 = vmatpush.msra.mxu0 %v135
  %159 = vmatpush.msra.mxu0 %v134
  %160 = vmatpush.msra.mxu0 %v133
  %161 = vmatpush.msra.mxu0 %v132
  %162 = vmatpush.msra.mxu0 %v131
  %163 = vmatpush.msra.mxu0 %v130
  %164 = vmatmul.f32.gmra.mxu0 %v146
  %v165 = vpop.f32.mrf.mxu0
  %v166 = vadd.f32 %v142, %v165
  %167 = vdwg.mxu0
  %168 = vst [vmem:[%s5] sm:$0xff] %v166
  // Predicated region
  $region22: #{states_network_forward.1} parent=0 // pred_check
    _
  $region23: #{states_network_forward.1} parent=0 // pred_check_branch
    %170 = sbr.rel (0) target = $region25
  $region24: #{states_network_forward.1} parent=0 // pred_region
    _
  $region25: #{states_network_forward.1} parent=0 // pred_fallthru
    _
  // Predicated region
  $region26: #{states_network_forward.1} parent=0 // pred_check
    _
  $region27: #{states_network_forward.1} parent=0 // pred_check_branch
    %172 = sbr.rel (0) target = $region29
  $region28: #{states_network_forward.1} parent=0 // pred_region
    _
  $region29: #{states_network_forward.1} parent=0 // pred_fallthru
    _

</llo_original>
